<compile_context>
chip_gen: v7x
topology: tpu7x:2x2x1
jax: 0.10.0
libtpu: 0.0.40
codegen_flags: <defaults>
</compile_context>

<pallas_src>
import jax
import jax.numpy as jnp
from jax.experimental import pallas as pl
from jax.experimental.pallas import tpu as pltpu

STATE_SIZE = 8     # LunarLanderContinuous-v3 observation dim
ACTION_SIZE = 2    # LunarLanderContinuous-v3 action dim
H1 = 256
H2 = 128
MAX_TB = 2048      # batch tile rows; ~a few MB of VMEM -> safe on v5e/v6e/v7x


def dqn_kernel(x_ref, w1_ref, b1_ref, w2_ref, b2_ref, w3_ref, b3_ref, out_ref):
    # fc1 + ReLU: bf16 MXU operands, f32 accumulation, f32 elementwise.
    h1 = jnp.dot(x_ref[...], w1_ref[...], preferred_element_type=jnp.float32)
    h1 = jnp.maximum(h1 + b1_ref[...], 0.0)
    # fc2 + ReLU
    h2 = jnp.dot(h1.astype(jnp.bfloat16), w2_ref[...],
                 preferred_element_type=jnp.float32)
    h2 = jnp.maximum(h2 + b2_ref[...], 0.0)
    # fc3 — un-padded ACTION_SIZE columns; the masked narrow store is trivial.
    out = jnp.dot(h2.astype(jnp.bfloat16), w3_ref[...],
                  preferred_element_type=jnp.float32)
    out_ref[...] = (out + b3_ref[...]).astype(out_ref.dtype)


def _round_up(n, m):
    return ((n + m - 1) // m) * m


@jax.jit
def dqn_forward(x, params):
    """x: (B, STATE_SIZE) bf16 (or f32, cast once here). -> (B, ACTION_SIZE) f32."""
    w1, b1, w2, b2, w3, b3 = (params["w1"], params["b1"], params["w2"],
                              params["b2"], params["w3"], params["b3"])
    # Feed the kernel bf16 observations (halves input HBM stream); no-op if the
    # caller already keeps the obs/replay buffer in bf16.
    if x.dtype != jnp.bfloat16:
        x = x.astype(jnp.bfloat16)
    B = x.shape[0]

    # Big tiles amortize per-grid-step overhead; cap at ceil(B/2) so the grid
    # has >=2 "parallel" steps whenever possible (both v7x TensorCores busy).
    tb = max(16, min(MAX_TB, _round_up(-(-B // 2), 16)))
    grid = (pl.cdiv(B, tb),)

    # Constant block index => the pipeline keeps weights/biases VMEM-resident
    # and skips re-DMA across grid steps (they total ~100 KB).
    const = lambda i: (0, 0)
    in_specs = [
        pl.BlockSpec((tb, STATE_SIZE), lambda i: (i, 0)),   # x tile (bf16)
        pl.BlockSpec((STATE_SIZE, H1), const),              # w1
        pl.BlockSpec((1, H1), const),                       # b1
        pl.BlockSpec((H1, H2), const),                      # w2
        pl.BlockSpec((1, H2), const),                       # b2
        pl.BlockSpec((H2, ACTION_SIZE), const),             # w3
        pl.BlockSpec((1, ACTION_SIZE), const),              # b3
    ]
    out_spec = pl.BlockSpec((tb, ACTION_SIZE), lambda i: (i, 0))

    flops = 2 * B * (STATE_SIZE * H1 + H1 * H2 + H2 * ACTION_SIZE)
    bytes_accessed = (
        B * STATE_SIZE * 2 + B * ACTION_SIZE * 4                 # x bf16, out f32
        + (STATE_SIZE * H1 + H1 * H2 + H2 * ACTION_SIZE) * 2     # bf16 weights
        + (H1 + H2 + ACTION_SIZE) * 4                            # f32 biases
    )

    return pl.pallas_call(
        dqn_kernel,
        out_shape=jax.ShapeDtypeStruct((B, ACTION_SIZE), jnp.float32),
        grid=grid,
        in_specs=in_specs,
        out_specs=out_spec,
        compiler_params=pltpu.CompilerParams(
            dimension_semantics=("parallel",)),
        cost_estimate=pl.CostEstimate(
            flops=flops, transcendentals=0, bytes_accessed=bytes_accessed),
    )(x, w1, b1, w2, b2, w3, b3)


def init_params(key):
    """PyTorch-style uniform fan-in init. Weights (in, out) bf16; biases (1, out) f32."""
    ks = jax.random.split(key, 6)

    def lin(kw, kb, fan_in, fan_out):
        bound = 1.0 / (fan_in ** 0.5)
        w = jax.random.uniform(kw, (fan_in, fan_out), jnp.float32, -bound, bound)
        b = jax.random.uniform(kb, (1, fan_out), jnp.float32, -bound, bound)
        return w.astype(jnp.bfloat16), b

    w1, b1 = lin(ks[0], ks[1], STATE_SIZE, H1)
    w2, b2 = lin(ks[2], ks[3], H1, H2)
    w3, b3 = lin(ks[4], ks[5], H2, ACTION_SIZE)
    return dict(w1=w1, b1=b1, w2=w2, b2=b2, w3=w3, b3=b3)


def dqn_ref(x, p):
    """Pure-JAX reference mirroring the kernel's bf16-operand / f32-accum math."""
    xb = x.astype(jnp.bfloat16)
    h1 = jnp.maximum(
        jnp.dot(xb, p["w1"], preferred_element_type=jnp.float32) + p["b1"], 0.0)
    h2 = jnp.maximum(
        jnp.dot(h1.astype(jnp.bfloat16), p["w2"],
                preferred_element_type=jnp.float32) + p["b2"], 0.0)
    return jnp.dot(h2.astype(jnp.bfloat16), p["w3"],
                   preferred_element_type=jnp.float32) + p["b3"]


if __name__ == "__main__":
    key = jax.random.PRNGKey(0)
    kx, kp = jax.random.split(key)
    batch = 2
    # Observation buffer stored in bf16 (what the kernel consumes directly).
    x = jax.random.normal(kx, (batch, STATE_SIZE), jnp.float32).astype(jnp.bfloat16)
    params = init_params(kp)

    out = jax.block_until_ready(dqn_forward(x, params))
    ref = dqn_ref(x, params)
    assert out.shape == (batch, ACTION_SIZE)
    assert jnp.allclose(out, ref, atol=2e-3, rtol=2e-3), "mismatch vs reference"

    # Larger, non-multiple-of-tile batch exercises the ragged 2-step grid path
    # (and the f32-input cast branch of the wrapper).
    big_b = 1000
    xb = jax.random.normal(jax.random.PRNGKey(1), (big_b, STATE_SIZE), jnp.float32)
    out_b = jax.block_until_ready(dqn_forward(xb, params))
    ref_b = dqn_ref(xb, params)
    assert out_b.shape == (big_b, ACTION_SIZE)
    assert jnp.allclose(out_b, ref_b, atol=2e-3, rtol=2e-3), "mismatch (big batch)"

    print("KERNEL_OK")
</pallas_src>

<mosaic_0001>
module attributes {stable_mosaic.version = 11 : i64} {
  func.func @dqn_kernel(%arg0: i32, %arg1: memref<16x8xbf16, #tpu.memory_space<vmem>>, %arg2: memref<8x256xbf16, #tpu.memory_space<vmem>>, %arg3: memref<1x256xf32, #tpu.memory_space<vmem>>, %arg4: memref<256x128xbf16, #tpu.memory_space<vmem>>, %arg5: memref<1x128xf32, #tpu.memory_space<vmem>>, %arg6: memref<128x2xbf16, #tpu.memory_space<vmem>>, %arg7: memref<1x2xf32, #tpu.memory_space<vmem>>, %arg8: memref<16x2xf32, #tpu.memory_space<vmem>>) attributes {dimension_semantics = [#tpu.dimension_semantics<parallel>], iteration_bounds = array<i64: 1>, scalar_prefetch = 0 : i64, scratch_operands = 0 : i64, tpu.core_type = #tpu.core_type<tc>, window_params = [{transform_indices = @transform_0, window_bounds = array<i64: 16, 8>}, {pipeline_mode = #tpu.pipeline_mode<synchronous>, transform_indices = @transform_1, window_bounds = array<i64: 8, 256>}, {pipeline_mode = #tpu.pipeline_mode<synchronous>, transform_indices = @transform_2, window_bounds = array<i64: 1, 256>}, {pipeline_mode = #tpu.pipeline_mode<synchronous>, transform_indices = @transform_3, window_bounds = array<i64: 256, 128>}, {pipeline_mode = #tpu.pipeline_mode<synchronous>, transform_indices = @transform_4, window_bounds = array<i64: 1, 128>}, {pipeline_mode = #tpu.pipeline_mode<synchronous>, transform_indices = @transform_5, window_bounds = array<i64: 128, 2>}, {pipeline_mode = #tpu.pipeline_mode<synchronous>, transform_indices = @transform_6, window_bounds = array<i64: 1, 2>}, {transform_indices = @transform_7, window_bounds = array<i64: 16, 2>}]} {
    %c0 = arith.constant 0 : index
    %c0_0 = arith.constant 0 : index
    %0 = vector.load %arg1[%c0, %c0_0] : memref<16x8xbf16, #tpu.memory_space<vmem>>, vector<16x8xbf16>
    %c0_1 = arith.constant 0 : index
    %c0_2 = arith.constant 0 : index
    %1 = vector.load %arg2[%c0_1, %c0_2] : memref<8x256xbf16, #tpu.memory_space<vmem>>, vector<8x256xbf16>
    %cst = arith.constant dense<0.000000e+00> : vector<16x256xf32>
    %2 = tpu.matmul %0, %1, %cst {dimension_numbers = #tpu.dot_dimension_numbers<[1], [0], [0], [1], [0, 0, 1, 1], [], []>} : vector<16x8xbf16>, vector<8x256xbf16>, vector<16x256xf32> -> vector<16x256xf32>
    %c0_3 = arith.constant 0 : index
    %c0_4 = arith.constant 0 : index
    %3 = vector.load %arg3[%c0_3, %c0_4] : memref<1x256xf32, #tpu.memory_space<vmem>>, vector<1x256xf32>
    %4 = vector.broadcast %3 : vector<1x256xf32> to vector<16x256xf32>
    %5 = arith.addf %2, %4 : vector<16x256xf32>
    %cst_5 = arith.constant 0.000000e+00 : f32
    %6 = vector.broadcast %cst_5 : f32 to vector<16x256xf32>
    %7 = arith.maximumf %5, %6 : vector<16x256xf32>
    %8 = arith.truncf %7 : vector<16x256xf32> to vector<16x256xbf16>
    %c0_6 = arith.constant 0 : index
    %c0_7 = arith.constant 0 : index
    %9 = vector.load %arg4[%c0_6, %c0_7] : memref<256x128xbf16, #tpu.memory_space<vmem>>, vector<256x128xbf16>
    %cst_8 = arith.constant dense<0.000000e+00> : vector<16x128xf32>
    %10 = tpu.matmul %8, %9, %cst_8 {dimension_numbers = #tpu.dot_dimension_numbers<[1], [0], [0], [1], [0, 0, 1, 1], [], []>} : vector<16x256xbf16>, vector<256x128xbf16>, vector<16x128xf32> -> vector<16x128xf32>
    %c0_9 = arith.constant 0 : index
    %c0_10 = arith.constant 0 : index
    %11 = vector.load %arg5[%c0_9, %c0_10] : memref<1x128xf32, #tpu.memory_space<vmem>>, vector<1x128xf32>
    %12 = vector.broadcast %11 : vector<1x128xf32> to vector<16x128xf32>
    %13 = arith.addf %10, %12 : vector<16x128xf32>
    %cst_11 = arith.constant 0.000000e+00 : f32
    %14 = vector.broadcast %cst_11 : f32 to vector<16x128xf32>
    %15 = arith.maximumf %13, %14 : vector<16x128xf32>
    %16 = arith.truncf %15 : vector<16x128xf32> to vector<16x128xbf16>
    %c0_12 = arith.constant 0 : index
    %c0_13 = arith.constant 0 : index
    %17 = vector.load %arg6[%c0_12, %c0_13] : memref<128x2xbf16, #tpu.memory_space<vmem>>, vector<128x2xbf16>
    %cst_14 = arith.constant dense<0.000000e+00> : vector<16x2xf32>
    %18 = tpu.matmul %16, %17, %cst_14 {dimension_numbers = #tpu.dot_dimension_numbers<[1], [0], [0], [1], [0, 0, 1, 1], [], []>} : vector<16x128xbf16>, vector<128x2xbf16>, vector<16x2xf32> -> vector<16x2xf32>
    %c0_15 = arith.constant 0 : index
    %c0_16 = arith.constant 0 : index
    %19 = vector.load %arg7[%c0_15, %c0_16] : memref<1x2xf32, #tpu.memory_space<vmem>>, vector<1x2xf32>
    %20 = vector.broadcast %19 : vector<1x2xf32> to vector<16x2xf32>
    %21 = arith.addf %18, %20 : vector<16x2xf32>
    %c0_17 = arith.constant 0 : index
    %c0_18 = arith.constant 0 : index
    %22 = vector.load %arg8[%c0_17, %c0_18] : memref<16x2xf32, #tpu.memory_space<vmem>>, vector<16x2xf32>
    tpu.vector_store %arg8[%c0_17, %c0_18], %21 {strides = array<i32>} : memref<16x2xf32, #tpu.memory_space<vmem>>, vector<16x2xf32>,
    return
  }
  func.func @transform_0(%arg0: i32) -> (i32, i32) {
    %c0_i32 = arith.constant 0 : i32
    %c0_i32_0 = arith.constant 0 : i32
    return %arg0, %c0_i32 : i32, i32
  }
  func.func @transform_1(%arg0: i32) -> (i32, i32) {
    %c0_i32 = arith.constant 0 : i32
    %c0_i32_0 = arith.constant 0 : i32
    %c0_i32_1 = arith.constant 0 : i32
    return %c0_i32, %c0_i32_0 : i32, i32
  }
  func.func @transform_2(%arg0: i32) -> (i32, i32) {
    %c0_i32 = arith.constant 0 : i32
    %c0_i32_0 = arith.constant 0 : i32
    %c0_i32_1 = arith.constant 0 : i32
    return %c0_i32, %c0_i32_0 : i32, i32
  }
  func.func @transform_3(%arg0: i32) -> (i32, i32) {
    %c0_i32 = arith.constant 0 : i32
    %c0_i32_0 = arith.constant 0 : i32
    %c0_i32_1 = arith.constant 0 : i32
    return %c0_i32, %c0_i32_0 : i32, i32
  }
  func.func @transform_4(%arg0: i32) -> (i32, i32) {
    %c0_i32 = arith.constant 0 : i32
    %c0_i32_0 = arith.constant 0 : i32
    %c0_i32_1 = arith.constant 0 : i32
    return %c0_i32, %c0_i32_0 : i32, i32
  }
  func.func @transform_5(%arg0: i32) -> (i32, i32) {
    %c0_i32 = arith.constant 0 : i32
    %c0_i32_0 = arith.constant 0 : i32
    %c0_i32_1 = arith.constant 0 : i32
    return %c0_i32, %c0_i32_0 : i32, i32
  }
  func.func @transform_6(%arg0: i32) -> (i32, i32) {
    %c0_i32 = arith.constant 0 : i32
    %c0_i32_0 = arith.constant 0 : i32
    %c0_i32_1 = arith.constant 0 : i32
    return %c0_i32, %c0_i32_0 : i32, i32
  }
  func.func @transform_7(%arg0: i32) -> (i32, i32) {
    %c0_i32 = arith.constant 0 : i32
    %c0_i32_0 = arith.constant 0 : i32
    return %arg0, %c0_i32 : i32, i32
  }
}

</mosaic_0001>

<llo_original>
// kernel: dqn_forward.1
$region0: #{dqn_forward.1}
  #allocation0 [shape = 'u32[]', space=smem, size = 0x4, offset = 0x4, fixed_abs, tag = 'smem constant byte address 0x4 - core index']
  #allocation1 [shape = 'u32[144,128]{1,0:T(1,128)}', space=vmem, size = 0x12000, scoped, tag = 'internal scratch']
  %s0 = inlined_call_operand.vmem [shape: bf16[2,8], index: 0, kind: input, shape index: {}]
  %s1 = inlined_call_operand.vmem [shape: bf16[8,256], index: 1, kind: input, shape index: {}]
  %s2 = inlined_call_operand.vmem [shape: f32[1,256], index: 2, kind: input, shape index: {}]
  %s3 = inlined_call_operand.hbm [shape: bf16[256,128], index: 3, kind: input, shape index: {}]
  %s4 = inlined_call_operand.vmem [shape: f32[1,128], index: 4, kind: input, shape index: {}]
  %s5 = inlined_call_operand.vmem [shape: bf16[128,2], index: 5, kind: input, shape index: {}]
  %s6 = inlined_call_operand.vmem [shape: f32[1,2], index: 6, kind: input, shape index: {}]
  %s7 = inlined_call_operand.hbm [shape: f32[2,2], index: 7, kind: output, shape index: {}]
  %s8 = sld [smem:[#allocation0]]
  $region42: #{dqn_forward.1} parent=0
    _
  %s10 = ssub.s32 1, %s8
  %s11 = scalar_select 0, %s10, %s8
  $region1: #{dqn_forward.1} parent=0
    #allocation2 [shape = 'u8[65536]{0}', space=vmem, size = 0x10000, scoped, tag = 'input window, operand 3, single buffered']
    #allocation3 [shape = 's32[1]{0}', space=sflag, size = 0x4, scoped, tag = 'scoped memory for dqn_forward.1']
    #allocation4 [shape = 's32[1]{0}', space=sflag, size = 0x4, scoped, tag = 'scoped memory for dqn_forward.1']
    #allocation5 [shape = 'u8[8192]{0}', space=vmem, size = 0x2000, scoped, tag = 'output window, operand 0, single buffered']
    %12 = vsyncpa [#allocation3], 0
    %13 = vsyncpa [#allocation4], 0
    // Predicated region
    $region2: #{dqn_forward.1} parent=1 // pred_check
      _
    $region3: #{dqn_forward.1} parent=1 // pred_check_branch
      %15 = sbr.rel (0) target = $region5
    $region4: #{dqn_forward.1} parent=1 // pred_region
      _
    $region5: #{dqn_forward.1} parent=1 // pred_fallthru
      _
    // Predicated region
    $region6: #{dqn_forward.1} parent=1 // pred_check
      _
    $region7: #{dqn_forward.1} parent=1 // pred_check_branch
      %17 = sbr.rel (0) target = $region9
    $region8: #{dqn_forward.1} parent=1 // pred_region
      _
    $region9: #{dqn_forward.1} parent=1 // pred_fallthru
      _
    // Predicated region
    $region10: #{dqn_forward.1} parent=1 // pred_check
      _
    $region11: #{dqn_forward.1} parent=1 // pred_check_branch
      %19 = sbr.rel (0) target = $region13
    $region12: #{dqn_forward.1} parent=1 // pred_region
      _
    $region13: #{dqn_forward.1} parent=1 // pred_fallthru
      _
    // Predicated region
    $region14: #{dqn_forward.1} parent=1 // pred_check
      _
    $region15: #{dqn_forward.1} parent=1 // pred_check_branch
      %21 = sbr.rel (0) target = $region17
    $region16: #{dqn_forward.1} parent=1 // pred_region
      %s23 = ssub.s32 2048, 2048
      %24 = vsyncadd [#allocation3], %s23
      %s25 = sshll.u32 [#allocation2], 4
      %s26 = int_to_ptr.vmem [resolvable:$true] %s25
      %31 = dma.hbm_to_vmem [thread:$0]  %s3, 2048, %s26, [#allocation3], 64, 64, 4
    $region17: #{dqn_forward.1} parent=1 // pred_fallthru
      _
    // Predicated region
    $region18: #{dqn_forward.1} parent=1 // pred_check
      _
    $region19: #{dqn_forward.1} parent=1 // pred_check_branch
      %33 = sbr.rel (0) target = $region21
    $region20: #{dqn_forward.1} parent=1 // pred_region
      _
    $region21: #{dqn_forward.1} parent=1 // pred_fallthru
      _
    // Predicated region
    $region22: #{dqn_forward.1} parent=1 // pred_check
      _
    $region23: #{dqn_forward.1} parent=1 // pred_check_branch
      %35 = sbr.rel (0) target = $region25
    $region24: #{dqn_forward.1} parent=1 // pred_region
      _
    $region25: #{dqn_forward.1} parent=1 // pred_fallthru
      _
    // Predicated region
    $region26: #{dqn_forward.1} parent=1 // pred_check
      _
    $region27: #{dqn_forward.1} parent=1 // pred_check_branch
      %37 = sbr.rel (0) target = $region29
    $region28: #{dqn_forward.1} parent=1 // pred_region
      _
    $region29: #{dqn_forward.1} parent=1 // pred_fallthru
      _
    // Predicated region
    $region30: #{dqn_forward.1} parent=1 // pred_check
      _
    $region31: #{dqn_forward.1} parent=1 // pred_check_branch
      %39 = sbr.rel (0) target = $region33
    $region32: #{dqn_forward.1} parent=1 // pred_region
      %40 = dma.done [#allocation3], 2048
    $region33: #{dqn_forward.1} parent=1 // pred_fallthru
      _
    %v42 = vld [vmem:[%s0] sm:$0x1]
    %v43 = vld [vmem:[%s0 + $0x1] sm:$0x1]
    %v44 = vld [vmem:[%s0 + $0x2] sm:$0x1]
    %v45 = vld [vmem:[%s0 + $0x3] sm:$0x1]
    %v46 = vld [vmem:[%s0 + $0x4] sm:$0x1]
    %v47 = vld [vmem:[%s0 + $0x5] sm:$0x1]
    %v48 = vld [vmem:[%s0 + $0x6] sm:$0x1]
    %v49 = vld [vmem:[%s0 + $0x7] sm:$0x1]
    %v50 = vld [vmem:[%s1] sm:$0xff]
    %v51 = vld [vmem:[%s2] sm:$0x3]
    %v53 = vlaneseq
    %v54 = vshrl.u32 %v53, 7
    %v55 = vsub.s32 0, %v54
    %v56 = vrot.slane %v51, %v55
    %v57 = vlaneseq
    %v58 = vshrl.u32 %v57, 7
    %v59 = vsub.s32 1, %v58
    %v60 = vrot.slane %v51, %v59
    %v71 = vcombine.low %v42, %v43
    %v72 = vcombine.low %v44, %v45
    %v73 = vcombine.low %v46, %v47
    %v74 = vcombine.low %v48, %v49
    %v76 = vunpack.c.l.s4 1966171168
    %v77 = vunpack.c.0.s8 %v76
    %v78 = vlaneseq
    %v79 = vshrl.u32 %v78, 7
    %v80 = vsub.s32 %v77, %v79
    %v81 = vrot.slane %v71, %v80
    %v83 = vunpack.c.l.s4 1966171168
    %v84 = vunpack.c.0.s8 %v83
    %v85 = vlaneseq
    %v86 = vshrl.u32 %v85, 7
    %v87 = vsub.s32 %v84, %v86
    %v88 = vrot.slane %v72, %v87
    %v90 = vunpack.c.l.s4 1966171168
    %v91 = vunpack.c.0.s8 %v90
    %v92 = vlaneseq
    %v93 = vshrl.u32 %v92, 7
    %v94 = vsub.s32 %v91, %v93
    %v95 = vrot.slane %v73, %v94
    %v97 = vunpack.c.l.s4 1966171168
    %v98 = vunpack.c.0.s8 %v97
    %v99 = vlaneseq
    %v100 = vshrl.u32 %v99, 7
    %v101 = vsub.s32 %v98, %v100
    %v102 = vrot.slane %v74, %v101
    %v103 = vcombine.low %v81, %v88
    %v104 = vcombine.low %v95, %v102
    %v106 = vunpack.c.l.s4 1966171168
    %v107 = vunpack.c.0.s8 %v106
    %v108 = vlaneseq
    %v109 = vshrl.u32 %v108, 7
    %v110 = vsub.s32 %v107, %v109
    %v111 = vrot.slane %v103, %v110
    %v113 = vunpack.c.l.s4 1966171168
    %v114 = vunpack.c.0.s8 %v113
    %v115 = vlaneseq
    %v116 = vshrl.u32 %v115, 7
    %v117 = vsub.s32 %v114, %v116
    %v118 = vrot.slane %v104, %v117
    %v119 = vcombine.low %v111, %v118
    %v121 = vunpack.c.l.b16 %v50
    %v122 = vunpack.c.h.b16 %v50
    %v123 = vpack.c.b16 %v121, %v121
    %v124 = vpack.c.b16 %v122, %v122
    %vm125 = vcmask 64512
    %v127 = vsel %vm125, %v119, 0
    %vm129 = vcmask 1043456
    %v131 = vsel %vm129, %v123, 0
    %v134 = vsel %vm129, %v124, 0
    %136 = vmatprep.subr.bf16.mxu0 %v134
    %137 = vmatpush1.bf16.msra.mxu0 %v131
    %138 = vmatprep.subr.bf16.mxu0 0
    %139 = vmatpush1.bf16.msra.mxu0 0
    %140 = vmatprep.subr.bf16.mxu0 0
    %141 = vmatpush1.bf16.msra.mxu0 0
    %142 = vmatprep.subr.bf16.mxu0 0
    %143 = vmatpush1.bf16.msra.mxu0 0
    %144 = vmatprep.subr.bf16.mxu0 0
    %145 = vmatpush1.bf16.msra.mxu0 0
    %146 = vmatprep.subr.bf16.mxu0 0
    %147 = vmatpush1.bf16.msra.mxu0 0
    %148 = vmatprep.subr.bf16.mxu0 0
    %149 = vmatpush1.bf16.msra.mxu0 0
    %150 = vmatprep.subr.bf16.mxu0 0
    %151 = vmatpush1.bf16.msra.mxu0 0
    %152 = vmatprep.subr.bf16.mxu0 0
    %153 = vmatpush1.bf16.msra.mxu0 0
    %154 = vmatprep.subr.bf16.mxu0 0
    %155 = vmatpush1.bf16.msra.mxu0 0
    %156 = vmatprep.subr.bf16.mxu0 0
    %157 = vmatpush1.bf16.msra.mxu0 0
    %158 = vmatprep.subr.bf16.mxu0 0
    %159 = vmatpush1.bf16.msra.mxu0 0
    %160 = vmatprep.subr.bf16.mxu0 0
    %161 = vmatpush1.bf16.msra.mxu0 0
    %162 = vmatprep.subr.bf16.mxu0 0
    %163 = vmatpush1.bf16.msra.mxu0 0
    %164 = vmatprep.subr.bf16.mxu0 0
    %165 = vmatpush1.bf16.msra.mxu0 0
    %166 = vmatprep.subr.bf16.mxu0 0
    %167 = vmatpush1.bf16.msra.mxu0 0
    %168 = vmatprep.mubr.bf16.mxu0 0
    %169 = vmatmul.mubr.bf16.gmra.mrb[0].mxu0 %v127
    %v170 = vpop.f32.mrb[0].mxu0
    %v171 = vadd.f32 %v56, %v170
    %v172 = vpop.f32.mrb[0].mxu0
    %v173 = vadd.f32 %v60, %v172
    %v174 = vpop.f32.mrb[0].mxu0
    %v175 = vadd.f32 %v56, %v174
    %v176 = vpop.f32.mrb[0].mxu0
    %v177 = vadd.f32 %v60, %v176
    %178 = vdwg.mxu0
    %v179 = vmax.f32 %v171, 0.0
    %v180 = vmax.f32 %v173, 0.0
    %v181 = vmax.f32 %v175, 0.0
    %v182 = vmax.f32 %v177, 0.0
    %v183 = vpack.c.bf16 %v181, %v179
    %v184 = vpack.c.bf16 %v182, %v180
    %v185 = vld [vmem:[#allocation2] sm:$0xf]
    %v186 = vld [vmem:[#allocation2 + $0x4] sm:$0xf]
    %v187 = vld [vmem:[#allocation2 + $0x8] sm:$0xf]
    %v188 = vld [vmem:[#allocation2 + $0xc] sm:$0xf]
    %v189 = vld [vmem:[#allocation2 + $0x10] sm:$0xf]
    %v190 = vld [vmem:[#allocation2 + $0x14] sm:$0xf]
    %v191 = vld [vmem:[#allocation2 + $0x18] sm:$0xf]
    %v192 = vld [vmem:[#allocation2 + $0x1c] sm:$0xf]
    %v193 = vld [vmem:[#allocation2 + $0x20] sm:$0xf]
    %v194 = vld [vmem:[#allocation2 + $0x24] sm:$0xf]
    %v195 = vld [vmem:[#allocation2 + $0x28] sm:$0xf]
    %v196 = vld [vmem:[#allocation2 + $0x2c] sm:$0xf]
    %v197 = vld [vmem:[#allocation2 + $0x30] sm:$0xf]
    %v198 = vld [vmem:[#allocation2 + $0x34] sm:$0xf]
    %v199 = vld [vmem:[#allocation2 + $0x38] sm:$0xf]
    %v200 = vld [vmem:[#allocation2 + $0x3c] sm:$0xf]
    %v201 = vld [vmem:[#allocation2 + $0x40] sm:$0xf]
    %v202 = vld [vmem:[#allocation2 + $0x44] sm:$0xf]
    %v203 = vld [vmem:[#allocation2 + $0x48] sm:$0xf]
    %v204 = vld [vmem:[#allocation2 + $0x4c] sm:$0xf]
    %v205 = vld [vmem:[#allocation2 + $0x50] sm:$0xf]
    %v206 = vld [vmem:[#allocation2 + $0x54] sm:$0xf]
    %v207 = vld [vmem:[#allocation2 + $0x58] sm:$0xf]
    %v208 = vld [vmem:[#allocation2 + $0x5c] sm:$0xf]
    %v209 = vld [vmem:[#allocation2 + $0x60] sm:$0xf]
    %v210 = vld [vmem:[#allocation2 + $0x64] sm:$0xf]
    %v211 = vld [vmem:[#allocation2 + $0x68] sm:$0xf]
    %v212 = vld [vmem:[#allocation2 + $0x6c] sm:$0xf]
    %v213 = vld [vmem:[#allocation2 + $0x70] sm:$0xf]
    %v214 = vld [vmem:[#allocation2 + $0x74] sm:$0xf]
    %v215 = vld [vmem:[#allocation2 + $0x78] sm:$0xf]
    %v216 = vld [vmem:[#allocation2 + $0x7c] sm:$0xf]
    %v217 = vld [vmem:[%s4] sm:$0x1]
    %v219 = vlaneseq
    %v220 = vshrl.u32 %v219, 7
    %v221 = vsub.s32 0, %v220
    %v222 = vrot.slane %v217, %v221
    %v256 = vunpack.c.l.b16 %v185
    %v257 = vunpack.c.l.b16 %v186
    %v258 = vunpack.c.l.b16 %v187
    %v259 = vunpack.c.l.b16 %v188
    %v260 = vunpack.c.l.b16 %v189
    %v261 = vunpack.c.l.b16 %v190
    %v262 = vunpack.c.l.b16 %v191
    %v263 = vunpack.c.l.b16 %v192
    %v264 = vunpack.c.l.b16 %v193
    %v265 = vunpack.c.l.b16 %v194
    %v266 = vunpack.c.l.b16 %v195
    %v267 = vunpack.c.l.b16 %v196
    %v268 = vunpack.c.l.b16 %v197
    %v269 = vunpack.c.l.b16 %v198
    %v270 = vunpack.c.l.b16 %v199
    %v271 = vunpack.c.l.b16 %v200
    %v272 = vunpack.c.l.b16 %v201
    %v273 = vunpack.c.l.b16 %v202
    %v274 = vunpack.c.l.b16 %v203
    %v275 = vunpack.c.l.b16 %v204
    %v276 = vunpack.c.l.b16 %v205
    %v277 = vunpack.c.l.b16 %v206
    %v278 = vunpack.c.l.b16 %v207
    %v279 = vunpack.c.l.b16 %v208
    %v280 = vunpack.c.l.b16 %v209
    %v281 = vunpack.c.l.b16 %v210
    %v282 = vunpack.c.l.b16 %v211
    %v283 = vunpack.c.l.b16 %v212
    %v284 = vunpack.c.l.b16 %v213
    %v285 = vunpack.c.l.b16 %v214
    %v286 = vunpack.c.l.b16 %v215
    %v287 = vunpack.c.l.b16 %v216
    %v288 = vpack.c.b16 %v257, %v256
    %v289 = vpack.c.b16 %v259, %v258
    %v290 = vpack.c.b16 %v261, %v260
    %v291 = vpack.c.b16 %v263, %v262
    %v292 = vpack.c.b16 %v265, %v264
    %v293 = vpack.c.b16 %v267, %v266
    %v294 = vpack.c.b16 %v269, %v268
    %v295 = vpack.c.b16 %v271, %v270
    %v296 = vpack.c.b16 %v273, %v272
    %v297 = vpack.c.b16 %v275, %v274
    %v298 = vpack.c.b16 %v277, %v276
    %v299 = vpack.c.b16 %v279, %v278
    %v300 = vpack.c.b16 %v281, %v280
    %v301 = vpack.c.b16 %v283, %v282
    %v302 = vpack.c.b16 %v285, %v284
    %v303 = vpack.c.b16 %v287, %v286
    %320 = vmatprep.subr.bf16.mxu0 0
    %321 = vmatpush1.bf16.msra.mxu0 %v288
    %322 = vmatprep.subr.bf16.mxu0 0
    %323 = vmatpush1.bf16.msra.mxu0 %v289
    %324 = vmatprep.subr.bf16.mxu0 0
    %325 = vmatpush1.bf16.msra.mxu0 %v290
    %326 = vmatprep.subr.bf16.mxu0 0
    %327 = vmatpush1.bf16.msra.mxu0 %v291
    %328 = vmatprep.subr.bf16.mxu0 0
    %329 = vmatpush1.bf16.msra.mxu0 %v292
    %330 = vmatprep.subr.bf16.mxu0 0
    %331 = vmatpush1.bf16.msra.mxu0 %v293
    %332 = vmatprep.subr.bf16.mxu0 0
    %333 = vmatpush1.bf16.msra.mxu0 %v294
    %334 = vmatprep.subr.bf16.mxu0 0
    %335 = vmatpush1.bf16.msra.mxu0 %v295
    %336 = vmatprep.subr.bf16.mxu0 0
    %337 = vmatpush1.bf16.msra.mxu0 %v296
    %338 = vmatprep.subr.bf16.mxu0 0
    %339 = vmatpush1.bf16.msra.mxu0 %v297
    %340 = vmatprep.subr.bf16.mxu0 0
    %341 = vmatpush1.bf16.msra.mxu0 %v298
    %342 = vmatprep.subr.bf16.mxu0 0
    %343 = vmatpush1.bf16.msra.mxu0 %v299
    %344 = vmatprep.subr.bf16.mxu0 0
    %345 = vmatpush1.bf16.msra.mxu0 %v300
    %346 = vmatprep.subr.bf16.mxu0 0
    %347 = vmatpush1.bf16.msra.mxu0 %v301
    %348 = vmatprep.subr.bf16.mxu0 0
    %349 = vmatpush1.bf16.msra.mxu0 %v302
    %350 = vmatprep.subr.bf16.mxu0 0
    %351 = vmatpush1.bf16.msra.mxu0 %v303
    %352 = vmatprep.mubr.bf16.mxu0 %v184
    %353 = vmatmul.mubr.bf16.gmra.mrb[0].mxu0 %v183
    %v354 = vpop.f32.mrb[0].mxu0
    %v355 = vadd.f32 %v222, %v354
    %v356 = vpop.f32.mrb[0].mxu0
    %v357 = vpop.f32.mrb[0].mxu0
    %v358 = vadd.f32 %v222, %v357
    %v359 = vpop.f32.mrb[0].mxu0
    %360 = vdwg.mxu0
    %v361 = vmax.f32 %v355, 0.0
    %v362 = vmax.f32 %v358, 0.0
    %v363 = vpack.c.bf16 %v362, %v361
    %v364 = vld [vmem:[%s5] sm:$0xf]
    %v365 = vld [vmem:[%s5 + $0x4] sm:$0xf]
    %v366 = vld [vmem:[%s5 + $0x8] sm:$0xf]
    %v367 = vld [vmem:[%s5 + $0xc] sm:$0xf]
    %v368 = vld [vmem:[%s5 + $0x10] sm:$0xf]
    %v369 = vld [vmem:[%s5 + $0x14] sm:$0xf]
    %v370 = vld [vmem:[%s5 + $0x18] sm:$0xf]
    %v371 = vld [vmem:[%s5 + $0x1c] sm:$0xf]
    %v372 = vld [vmem:[%s5 + $0x20] sm:$0xf]
    %v373 = vld [vmem:[%s5 + $0x24] sm:$0xf]
    %v374 = vld [vmem:[%s5 + $0x28] sm:$0xf]
    %v375 = vld [vmem:[%s5 + $0x2c] sm:$0xf]
    %v376 = vld [vmem:[%s5 + $0x30] sm:$0xf]
    %v377 = vld [vmem:[%s5 + $0x34] sm:$0xf]
    %v378 = vld [vmem:[%s5 + $0x38] sm:$0xf]
    %v379 = vld [vmem:[%s5 + $0x3c] sm:$0xf]
    %v380 = vld [vmem:[%s6] sm:$0x1]
    %v382 = vlaneseq
    %v383 = vshrl.u32 %v382, 7
    %v384 = vsub.s32 0, %v383
    %v385 = vrot.slane %v380, %v384
    %v403 = vunpack.c.l.b16 %v364
    %v404 = vunpack.c.l.b16 %v365
    %v405 = vunpack.c.l.b16 %v366
    %v406 = vunpack.c.l.b16 %v367
    %v407 = vunpack.c.l.b16 %v368
    %v408 = vunpack.c.l.b16 %v369
    %v409 = vunpack.c.l.b16 %v370
    %v410 = vunpack.c.l.b16 %v371
    %v411 = vunpack.c.l.b16 %v372
    %v412 = vunpack.c.l.b16 %v373
    %v413 = vunpack.c.l.b16 %v374
    %v414 = vunpack.c.l.b16 %v375
    %v415 = vunpack.c.l.b16 %v376
    %v416 = vunpack.c.l.b16 %v377
    %v417 = vunpack.c.l.b16 %v378
    %v418 = vunpack.c.l.b16 %v379
    %v419 = vpack.c.b16 %v404, %v403
    %v420 = vpack.c.b16 %v406, %v405
    %v421 = vpack.c.b16 %v408, %v407
    %v422 = vpack.c.b16 %v410, %v409
    %v423 = vpack.c.b16 %v412, %v411
    %v424 = vpack.c.b16 %v414, %v413
    %v425 = vpack.c.b16 %v416, %v415
    %v426 = vpack.c.b16 %v418, %v417
    %435 = vmatprep.subr.bf16.mxu0 0
    %436 = vmatpush1.bf16.msra.mxu0 %v419
    %437 = vmatprep.subr.bf16.mxu0 0
    %438 = vmatpush1.bf16.msra.mxu0 %v420
    %439 = vmatprep.subr.bf16.mxu0 0
    %440 = vmatpush1.bf16.msra.mxu0 %v421
    %441 = vmatprep.subr.bf16.mxu0 0
    %442 = vmatpush1.bf16.msra.mxu0 %v422
    %443 = vmatprep.subr.bf16.mxu0 0
    %444 = vmatpush1.bf16.msra.mxu0 %v423
    %445 = vmatprep.subr.bf16.mxu0 0
    %446 = vmatpush1.bf16.msra.mxu0 %v424
    %447 = vmatprep.subr.bf16.mxu0 0
    %448 = vmatpush1.bf16.msra.mxu0 %v425
    %449 = vmatprep.subr.bf16.mxu0 0
    %450 = vmatpush1.bf16.msra.mxu0 %v426
    %451 = vmatprep.subr.bf16.mxu0 0
    %452 = vmatpush1.bf16.msra.mxu0 0
    %453 = vmatprep.subr.bf16.mxu0 0
    %454 = vmatpush1.bf16.msra.mxu0 0
    %455 = vmatprep.subr.bf16.mxu0 0
    %456 = vmatpush1.bf16.msra.mxu0 0
    %457 = vmatprep.subr.bf16.mxu0 0
    %458 = vmatpush1.bf16.msra.mxu0 0
    %459 = vmatprep.subr.bf16.mxu0 0
    %460 = vmatpush1.bf16.msra.mxu0 0
    %461 = vmatprep.subr.bf16.mxu0 0
    %462 = vmatpush1.bf16.msra.mxu0 0
    %463 = vmatprep.subr.bf16.mxu0 0
    %464 = vmatpush1.bf16.msra.mxu0 0
    %465 = vmatprep.subr.bf16.mxu0 0
    %466 = vmatpush1.bf16.msra.mxu0 0
    %467 = vmatprep.mubr.bf16.mxu0 0
    %468 = vmatmul.mubr.bf16.gmra.mrb[0].mxu0 %v363
    %v469 = vpop.f32.mrb[0].mxu0
    %v470 = vadd.f32 %v385, %v469
    %v471 = vpop.f32.mrb[0].mxu0
    %v472 = vpop.f32.mrb[0].mxu0
    %v473 = vadd.f32 %v385, %v472
    %v474 = vpop.f32.mrb[0].mxu0
    %475 = vdwg.mxu0
    %vm476 = vcmask 15360
    %477 = vst.msk [vmem:[#allocation5] sm:$0xff] %vm476, %v470
    %478 = vst.msk [vmem:[#allocation5 + $0x8] sm:$0xff] %vm476, %v473
    // Predicated region
    $region34: #{dqn_forward.1} parent=1 // pred_check
      _
    $region35: #{dqn_forward.1} parent=1 // pred_check_branch
      %480 = sbr.rel (0) target = $region37
    $region36: #{dqn_forward.1} parent=1 // pred_region
      %s482 = ssub.s32 256, 32
      %483 = vsyncadd [#allocation4], %s482
      %s484 = sshll.u32 [#allocation5], 4
      %s485 = int_to_ptr.vmem [resolvable:$true] %s484
      %490 = dma.vmem_to_hbm [thread:$0]  %s485, 32, %s7, [#allocation4], 32, 32, 2
    $region37: #{dqn_forward.1} parent=1 // pred_fallthru
      _
    // Predicated region
    $region38: #{dqn_forward.1} parent=1 // pred_check
      _
    $region39: #{dqn_forward.1} parent=1 // pred_check_branch
      %492 = sbr.rel (0) target = $region41
    $region40: #{dqn_forward.1} parent=1 // pred_region
      %493 = dma.done [#allocation4], 256
    $region41: #{dqn_forward.1} parent=1 // pred_fallthru
      _
    %494 = vsyncpa [#allocation3], 1
    %495 = vsyncpa [#allocation4], 1

</llo_original>
